<compile_context>
chip_gen: v7x
topology: tpu7x:2x2x1
jax: 0.10.0
libtpu: 0.0.40
codegen_flags: <defaults>
</compile_context>

<pallas_src>
import functools
import math

import jax
import jax.numpy as jnp
from jax.experimental import pallas as pl
from jax.experimental.pallas import tpu as pltpu


def _build_pe_table(max_len: int, d_model: int) -> jnp.ndarray:
    """Deterministic sinusoidal table, identical math to the PyTorch __init__."""
    position = jnp.arange(max_len, dtype=jnp.float32)[:, None]              # [L, 1]
    div_term = jnp.exp(
        jnp.arange(0, d_model, 2, dtype=jnp.float32)
        * (-math.log(10000.0) / d_model)
    )                                                                        # [D/2]
    ang = position * div_term                                                # [L, D/2]
    # interleave sin/cos -> pe[:, 0::2] = sin, pe[:, 1::2] = cos
    pe = jnp.stack([jnp.sin(ang), jnp.cos(ang)], axis=-1).reshape(max_len, d_model)
    return pe.astype(jnp.float32)


def _pe_dropout_kernel(*refs, batch: int, drop_p: float):
    # Lane-dense layout: x/out/bits blocks are [TS, B*D], pe block is [TS, D].
    if drop_p > 0.0:
        x_ref, pe_ref, bits_ref, o_ref = refs
    else:
        x_ref, pe_ref, o_ref = refs

    x = x_ref[...]                          # [TS, B*D]
    pe = pe_ref[...]                        # [TS, D]
    pe_bd = jnp.tile(pe, (1, batch))        # [TS, B*D]: PE broadcast over batch
    y = x + pe_bd

    if drop_p > 0.0:
        # inverted dropout: keep with prob (1 - p), scale kept values by 1/(1-p).
        bits = bits_ref[...]                # uint32, same block shape as x
        thresh = jnp.uint32(min(int(drop_p * 4294967296.0), 4294967295))
        keep = bits >= thresh               # single integer compare per element
        scale = jnp.array(1.0 / (1.0 - drop_p), dtype=y.dtype)
        y = jnp.where(keep, y * scale, jnp.zeros_like(y))

    o_ref[...] = y


def _pick_block_rows(seq_len: int, row_bytes: int, budget_bytes: int = 2 << 20) -> int:
    """Seq-tile rows: multiple of 8 (or full extent), ~budget_bytes per x block."""
    if seq_len <= 8:
        return seq_len
    rows = max(8, (budget_bytes // max(row_bytes, 1)) // 8 * 8)
    return min(seq_len, rows)


def positional_encoding_forward(x, pe_table, *, drop_p: float = 0.1, rng_key=None):
    """x: [seq_len, batch, d_model] -> same shape (PE add + dropout)."""
    seq_len, batch, d_model = x.shape
    dtype = x.dtype
    itemsize = jnp.dtype(dtype).itemsize
    bd = batch * d_model

    # Lane-dense view of the activations (last dim as wide as possible).
    x2 = x.reshape(seq_len, bd)
    pe_slice = pe_table[:seq_len, :].astype(dtype)

    ts = _pick_block_rows(seq_len, bd * itemsize)
    grid = (pl.cdiv(seq_len, ts),)

    in_specs = [
        pl.BlockSpec((ts, bd), lambda i: (i, 0)),        # x
        pl.BlockSpec((ts, d_model), lambda i: (i, 0)),   # pe (seq-index only)
    ]
    args = [x2, pe_slice]
    bytes_accessed = 2 * seq_len * bd * itemsize + seq_len * d_model * itemsize

    if drop_p > 0.0:
        # TODO(synk): dropout randomness is generated host-side with jax.random
        # (cannot bit-match torch's RNG stream; in-kernel pltpu.prng_* is avoided
        # because it does not lower in interpret mode).
        if rng_key is None:
            rng_key = jax.random.PRNGKey(0)
        bits = jax.random.bits(rng_key, (seq_len, bd), dtype=jnp.uint32)
        in_specs.append(pl.BlockSpec((ts, bd), lambda i: (i, 0)))
        args.append(bits)
        bytes_accessed += seq_len * bd * 4

    kernel = functools.partial(_pe_dropout_kernel, batch=batch, drop_p=drop_p)

    out2 = pl.pallas_call(
        kernel,
        out_shape=jax.ShapeDtypeStruct((seq_len, bd), dtype),
        grid=grid,
        in_specs=in_specs,
        out_specs=pl.BlockSpec((ts, bd), lambda i: (i, 0)),
        compiler_params=pltpu.CompilerParams(
            dimension_semantics=("parallel",),
        ),
        cost_estimate=pl.CostEstimate(
            flops=2 * seq_len * bd,
            transcendentals=0,
            bytes_accessed=bytes_accessed,
        ),
    )(*args)

    return out2.reshape(seq_len, batch, d_model)


if __name__ == "__main__":
    SEQ, BATCH, D_MODEL = 8, 2, 32
    MAX_LEN = 5000
    DROP_P = 0.1

    key = jax.random.PRNGKey(0)
    k_x, k_drop = jax.random.split(key)
    x = jax.random.normal(k_x, (SEQ, BATCH, D_MODEL), dtype=jnp.float32)

    pe_table = _build_pe_table(MAX_LEN, D_MODEL)
    ref = x + pe_table[:SEQ, :][:, None, :]

    # Deterministic path (dropout disabled) must match the reference exactly.
    out_nodrop = positional_encoding_forward(x, pe_table, drop_p=0.0)
    jax.block_until_ready(out_nodrop)
    assert jnp.allclose(out_nodrop, ref, atol=1e-6), "PE add mismatch"

    # Training-mode forward (PE add + inverted dropout).
    out = positional_encoding_forward(x, pe_table, drop_p=DROP_P, rng_key=k_drop)
    jax.block_until_ready(out)

    # Every element is either dropped (0) or the reference scaled by 1/(1-p).
    scaled = ref * (1.0 / (1.0 - DROP_P))
    ok = jnp.all((out == 0.0) | jnp.isclose(out, scaled, atol=1e-5))
    assert bool(ok), "dropout output is not {0, ref/(1-p)}"

    print("KERNEL_OK")
</pallas_src>

<mosaic_0001>
module attributes {stable_mosaic.version = 11 : i64} {
  func.func @_pe_dropout_kernel(%arg0: i32, %arg1: memref<8x64xf32, #tpu.memory_space<vmem>>, %arg2: memref<8x32xf32, #tpu.memory_space<vmem>>, %arg3: memref<8x64xf32, #tpu.memory_space<vmem>>) attributes {dimension_semantics = [#tpu.dimension_semantics<parallel>], iteration_bounds = array<i64: 1>, scalar_prefetch = 0 : i64, scratch_operands = 0 : i64, tpu.core_type = #tpu.core_type<tc>, window_params = [{transform_indices = @transform_0, window_bounds = array<i64: 8, 64>}, {transform_indices = @transform_1, window_bounds = array<i64: 8, 32>}, {transform_indices = @transform_2, window_bounds = array<i64: 8, 64>}]} {
    %c0 = arith.constant 0 : index
    %c0_0 = arith.constant 0 : index
    %0 = vector.load %arg1[%c0, %c0_0] : memref<8x64xf32, #tpu.memory_space<vmem>>, vector<8x64xf32>
    %c0_1 = arith.constant 0 : index
    %c0_2 = arith.constant 0 : index
    %1 = vector.load %arg2[%c0_1, %c0_2] : memref<8x32xf32, #tpu.memory_space<vmem>>, vector<8x32xf32>
    %2 = tpu.concatenate %1, %1 in 1 : vector<8x32xf32>, vector<8x32xf32> -> vector<8x64xf32>
    %3 = arith.addf %0, %2 : vector<8x64xf32>
    %c0_3 = arith.constant 0 : index
    %c0_4 = arith.constant 0 : index
    %4 = vector.load %arg3[%c0_3, %c0_4] : memref<8x64xf32, #tpu.memory_space<vmem>>, vector<8x64xf32>
    tpu.vector_store %arg3[%c0_3, %c0_4], %3 {strides = array<i32>} : memref<8x64xf32, #tpu.memory_space<vmem>>, vector<8x64xf32>,
    return
  }
  func.func @transform_0(%arg0: i32) -> (i32, i32) {
    %c0_i32 = arith.constant 0 : i32
    %c0_i32_0 = arith.constant 0 : i32
    return %arg0, %c0_i32 : i32, i32
  }
  func.func @transform_1(%arg0: i32) -> (i32, i32) {
    %c0_i32 = arith.constant 0 : i32
    %c0_i32_0 = arith.constant 0 : i32
    return %arg0, %c0_i32 : i32, i32
  }
  func.func @transform_2(%arg0: i32) -> (i32, i32) {
    %c0_i32 = arith.constant 0 : i32
    %c0_i32_0 = arith.constant 0 : i32
    return %arg0, %c0_i32 : i32, i32
  }
}

</mosaic_0001>

<llo_original>
// kernel: tpu_custom_call.1
$region0: #{tpu_custom_call.1}
  #allocation0 [shape = 'u32[]', space=smem, size = 0x4, offset = 0x4, fixed_abs, tag = 'smem constant byte address 0x4 - core index']
  #allocation1 [shape = 'u32[144,128]{1,0:T(1,128)}', space=vmem, size = 0x12000, scoped, tag = 'internal scratch']
  %s0 = inlined_call_operand.hbm [shape: f32[8,64], index: 0, kind: input, shape index: {}]
  %s1 = inlined_call_operand.hbm [shape: f32[8,32], index: 1, kind: input, shape index: {}]
  %s2 = inlined_call_operand.hbm [shape: f32[8,64], index: 2, kind: output, shape index: {}]
  %s3 = sld [smem:[#allocation0]]
  $region26: #{tpu_custom_call.1} parent=0
    _
  %s5 = ssub.s32 1, %s3
  %s6 = scalar_select 0, %s5, %s3
  $region1: #{tpu_custom_call.1} parent=0
    #allocation2 [shape = 'u8[4096]{0}', space=vmem, size = 0x1000, scoped, tag = 'input window, operand 0, single buffered']
    #allocation3 [shape = 's32[1]{0}', space=sflag, size = 0x4, scoped, tag = 'scoped memory for tpu_custom_call.1']
    #allocation4 [shape = 's32[1]{0}', space=sflag, size = 0x4, scoped, tag = 'scoped memory for tpu_custom_call.1']
    #allocation5 [shape = 'u8[4096]{0}', space=vmem, size = 0x1000, scoped, tag = 'input window, operand 1, single buffered']
    #allocation6 [shape = 's32[1]{0}', space=sflag, size = 0x4, scoped, tag = 'scoped memory for tpu_custom_call.1']
    #allocation7 [shape = 'u8[4096]{0}', space=vmem, size = 0x1000, scoped, tag = 'output window, operand 0, single buffered']
    %7 = vsyncpa [#allocation3], 0
    %8 = vsyncpa [#allocation6], 0
    %9 = vsyncpa [#allocation4], 0
    // Predicated region
    $region2: #{tpu_custom_call.1} parent=1 // pred_check
      _
    $region3: #{tpu_custom_call.1} parent=1 // pred_check_branch
      %11 = sbr.rel (0) target = $region5
    $region4: #{tpu_custom_call.1} parent=1 // pred_region
      %s13 = ssub.s32 128, 128
      %14 = vsyncadd [#allocation3], %s13
      %s16 = sshll.u32 [#allocation2], 4
      %s17 = int_to_ptr.vmem [resolvable:$true] %s16
      %19 = dma.hbm_to_vmem [thread:$0]  %s0, 128, %s17, [#allocation3]
    $region5: #{tpu_custom_call.1} parent=1 // pred_fallthru
      _
    // Predicated region
    $region6: #{tpu_custom_call.1} parent=1 // pred_check
      _
    $region7: #{tpu_custom_call.1} parent=1 // pred_check_branch
      %21 = sbr.rel (0) target = $region9
    $region8: #{tpu_custom_call.1} parent=1 // pred_region
      %s23 = ssub.s32 128, 128
      %24 = vsyncadd [#allocation6], %s23
      %s26 = sshll.u32 [#allocation5], 4
      %s27 = int_to_ptr.vmem [resolvable:$true] %s26
      %29 = dma.hbm_to_vmem [thread:$0]  %s1, 128, %s27, [#allocation6]
    $region9: #{tpu_custom_call.1} parent=1 // pred_fallthru
      _
    // Predicated region
    $region10: #{tpu_custom_call.1} parent=1 // pred_check
      _
    $region11: #{tpu_custom_call.1} parent=1 // pred_check_branch
      %31 = sbr.rel (0) target = $region13
    $region12: #{tpu_custom_call.1} parent=1 // pred_region
      %32 = dma.done [#allocation3], 128
    $region13: #{tpu_custom_call.1} parent=1 // pred_fallthru
      _
    // Predicated region
    $region14: #{tpu_custom_call.1} parent=1 // pred_check
      _
    $region15: #{tpu_custom_call.1} parent=1 // pred_check_branch
      %34 = sbr.rel (0) target = $region17
    $region16: #{tpu_custom_call.1} parent=1 // pred_region
      %35 = dma.done [#allocation6], 128
    $region17: #{tpu_custom_call.1} parent=1 // pred_fallthru
      _
    %v36 = vld [vmem:[#allocation2] sm:$0xff]
    %v37 = vld [vmem:[#allocation5] sm:$0xff]
    %39 = vrot.lane.b32.xlu0 %v37, 32
    %v40 = vpop.permute.xlu0 %39
    %vm42 = vcmask 261120
    %v43 = vsel %vm42, %v37, %v40
    %v44 = vadd.f32 %v36, %v43
    %vm45 = vcmask 523264
    %46 = vst.msk [vmem:[#allocation7] sm:$0xff] %vm45, %v44
    // Predicated region
    $region18: #{tpu_custom_call.1} parent=1 // pred_check
      _
    $region19: #{tpu_custom_call.1} parent=1 // pred_check_branch
      %48 = sbr.rel (0) target = $region21
    $region20: #{tpu_custom_call.1} parent=1 // pred_region
      %s50 = ssub.s32 128, 128
      %51 = vsyncadd [#allocation4], %s50
      %s53 = sshll.u32 [#allocation7], 4
      %s54 = int_to_ptr.vmem [resolvable:$true] %s53
      %56 = dma.vmem_to_hbm [thread:$0]  %s54, 128, %s2, [#allocation4]
    $region21: #{tpu_custom_call.1} parent=1 // pred_fallthru
      _
    // Predicated region
    $region22: #{tpu_custom_call.1} parent=1 // pred_check
      _
    $region23: #{tpu_custom_call.1} parent=1 // pred_check_branch
      %58 = sbr.rel (0) target = $region25
    $region24: #{tpu_custom_call.1} parent=1 // pred_region
      %59 = dma.done [#allocation4], 128
    $region25: #{tpu_custom_call.1} parent=1 // pred_fallthru
      _
    %60 = vsyncpa [#allocation3], 1
    %61 = vsyncpa [#allocation6], 1
    %62 = vsyncpa [#allocation4], 1

</llo_original>
